<compile_context>
chip_gen: v5e
topology: v5e:2x2
jax: 0.10.0
libtpu: 0.0.40
codegen_flags: <defaults>
</compile_context>

<pallas_src>
import functools

import jax
import jax.numpy as jnp
from jax.experimental import pallas as pl
from jax.experimental.pallas import tpu as pltpu

OBS_DIM = 172
N_CARDS = 54
HID = 256
FUSED_K = 256        # fc1 contraction dim after fusing [x | onehot(card)] -> 256


def kitty_kernel(x_ref, card_ref,
                 w1_ref, b1_ref,
                 w2_ref, b2_ref,
                 w3_ref, b3_ref,
                 w4_ref, b4_ref,
                 out_ref):
    x = x_ref[...]                                            # (TB, 172) f32
    card = card_ref[...]                                      # (TB, 1) int32
    tb = x.shape[0]

    # One-hot tail occupying lanes 172..255 of the fused fc1 operand.
    # Fused weight rows 172..225 hold emb_table @ W1[172:], rows 226..255 = 0,
    # so garbage card values in a ragged tail tile are harmless.
    iota = jax.lax.broadcasted_iota(jnp.int32, (tb, FUSED_K - OBS_DIM), 1)
    tail = (iota == card).astype(jnp.float32)                 # (TB, 84)

    # fc1 on hstack([x, emb]) as ONE K=256 MXU pass.
    a1 = jnp.concatenate([x, tail], axis=-1).astype(jnp.bfloat16)   # (TB, 256)
    h = jnp.dot(a1, w1_ref[...],
                preferred_element_type=jnp.float32) + b1_ref[...]
    h = jnp.maximum(h, 0.0)

    h = jnp.dot(h.astype(jnp.bfloat16), w2_ref[...],
                preferred_element_type=jnp.float32) + b2_ref[...]
    h = jnp.maximum(h, 0.0)

    h = jnp.dot(h.astype(jnp.bfloat16), w3_ref[...],
                preferred_element_type=jnp.float32) + b3_ref[...]
    h = jnp.maximum(h, 0.0)

    # fc4: N=1 -> VPU multiply + lane reduce (skip an MXU pass), then a
    # sublane->lane transpose so the output block is lane-dense (1, TB).
    v = jnp.sum(h * w4_ref[...], axis=-1, keepdims=True) + b4_ref[...]   # (TB, 1)
    out_ref[...] = jnp.transpose(v)                                      # (1, TB)


@functools.partial(jax.jit, static_argnames=("tile_b",))
def kitty_forward(x, card, kp, tile_b=2048):
    """x: (B, 172) f32, card: (B,) int -> (B, 1) f32."""
    B = x.shape[0]
    card2 = card.astype(jnp.int32).reshape(B, 1)

    # Batch tile selection: big enough to amortise per-step overhead, >=2 grid
    # steps whenever possible so both v7x TensorCores get work.  No batch
    # padding: the last (possibly ragged) tile's OOB rows are discarded below.
    if B > tile_b:
        tb = tile_b                                  # multiple of 8
    elif B >= 16:
        tb = ((pl.cdiv(B, 2) + 7) // 8) * 8          # 2 grid steps
    else:
        tb = B                                       # single full-extent tile
    num_tiles = pl.cdiv(B, tb)
    grid = (num_tiles,)

    tiled = lambda shape: pl.BlockSpec(shape, lambda i: (i, 0))
    resident = lambda shape: pl.BlockSpec(shape, lambda i: (0, 0))

    rows = num_tiles * tb
    flops_per_row = 2 * (FUSED_K * HID + 2 * HID * HID + HID)
    weight_bytes = sum(int(v.size) * v.dtype.itemsize for v in kp.values())
    cost = pl.CostEstimate(
        flops=flops_per_row * rows,
        transcendentals=0,
        bytes_accessed=B * OBS_DIM * 4 + B * 4 + weight_bytes + rows * 4,
    )

    out = pl.pallas_call(
        kitty_kernel,
        out_shape=jax.ShapeDtypeStruct((num_tiles, tb), jnp.float32),
        grid=grid,
        in_specs=[
            tiled((tb, OBS_DIM)),            # x   (f32, streamed per tile)
            tiled((tb, 1)),                  # card
            resident((FUSED_K, HID)),        # fused fc1 weight [W1a; emb@W1b; 0] bf16
            resident((1, HID)),              # b1
            resident((HID, HID)),            # w2 (bf16)
            resident((1, HID)),              # b2
            resident((HID, HID)),            # w3 (bf16)
            resident((1, HID)),              # b3
            resident((1, HID)),              # w4 row (f32, VPU reduce)
            resident((1, 1)),                # b4
        ],
        out_specs=tiled((1, tb)),            # lane-dense output rows
        compiler_params=pltpu.CompilerParams(
            dimension_semantics=("parallel",),
            vmem_limit_bytes=48 * 1024 * 1024,
        ),
        cost_estimate=cost,
    )(x, card2,
      kp["w1"], kp["b1"],
      kp["w2"], kp["b2"],
      kp["w3"], kp["b3"],
      kp["w4"], kp["b4"])

    return out.reshape(-1)[:B].reshape(B, 1)


def init_params(key):
    """f32 params mimicking the PyTorch module's shapes / default init."""
    ks = jax.random.split(key, 10)

    def linear(kw, kb, fan_in, fan_out):
        bound = 1.0 / jnp.sqrt(fan_in)
        # Stored transposed: (fan_in, fan_out) so forward does x @ W.
        w = jax.random.uniform(kw, (fan_in, fan_out), jnp.float32, -bound, bound)
        b = jax.random.uniform(kb, (1, fan_out), jnp.float32, -bound, bound)
        return w, b

    emb = jax.random.normal(ks[0], (N_CARDS, N_CARDS), jnp.float32)
    w1, b1 = linear(ks[1], ks[2], OBS_DIM + N_CARDS, HID)    # (226, 256)
    w2, b2 = linear(ks[3], ks[4], HID, HID)
    w3, b3 = linear(ks[5], ks[6], HID, HID)
    w4, b4 = linear(ks[7], ks[8], HID, 1)
    return {"emb": emb, "w1": w1, "b1": b1, "w2": w2, "b2": b2,
            "w3": w3, "b3": b3, "w4": w4, "b4": b4}


def prepare_kernel_params(p):
    """Fold the embedding into fc1, fuse to one (256,256) weight, cast to bf16."""
    w1a = p["w1"][:OBS_DIM]                                  # (172, 256)
    w1b = p["emb"] @ p["w1"][OBS_DIM:]                       # (54, 256), emb folded in
    pad = jnp.zeros((FUSED_K - OBS_DIM - N_CARDS, HID), jnp.float32)
    w1 = jnp.concatenate([w1a, w1b, pad], axis=0)            # (256, 256)
    return {
        "w1": w1.astype(jnp.bfloat16),
        "b1": p["b1"],
        "w2": p["w2"].astype(jnp.bfloat16), "b2": p["b2"],
        "w3": p["w3"].astype(jnp.bfloat16), "b3": p["b3"],
        "w4": p["w4"].reshape(1, HID),                       # f32 row for VPU reduce
        "b4": p["b4"].reshape(1, 1),
    }


def reference_forward(x, card, kp):
    """Plain-JAX forward using the identical mixed-precision math."""
    card = card.astype(jnp.int32)
    tail = (jnp.arange(FUSED_K - OBS_DIM)[None, :] == card[:, None]).astype(jnp.float32)
    a1 = jnp.concatenate([x, tail], axis=-1).astype(jnp.bfloat16)
    h = jnp.dot(a1, kp["w1"], preferred_element_type=jnp.float32) + kp["b1"]
    h = jnp.maximum(h, 0.0)
    h = jnp.dot(h.astype(jnp.bfloat16), kp["w2"],
                preferred_element_type=jnp.float32) + kp["b2"]
    h = jnp.maximum(h, 0.0)
    h = jnp.dot(h.astype(jnp.bfloat16), kp["w3"],
                preferred_element_type=jnp.float32) + kp["b3"]
    h = jnp.maximum(h, 0.0)
    return jnp.sum(h * kp["w4"], axis=-1, keepdims=True) + kp["b4"]


if __name__ == "__main__":
    key = jax.random.PRNGKey(0)
    kp_key, kx, kc = jax.random.split(key, 3)

    B = 8
    params = init_params(kp_key)
    kparams = prepare_kernel_params(params)
    x = jax.random.normal(kx, (B, OBS_DIM), jnp.float32)
    card = jax.random.randint(kc, (B,), 0, N_CARDS, dtype=jnp.int32)

    out = kitty_forward(x, card, kparams)
    out = jax.block_until_ready(out)

    ref = reference_forward(x, card, kparams)
    assert out.shape == (B, 1)
    assert jnp.allclose(out, ref, atol=1e-2, rtol=1e-2), "mismatch vs JAX reference"

    print("KERNEL_OK")
</pallas_src>

<mosaic_0001>
module attributes {stable_mosaic.version = 11 : i64} {
  func.func @kitty_kernel(%arg0: i32, %arg1: memref<8x172xf32, #tpu.memory_space<vmem>>, %arg2: memref<8x1xi32, #tpu.memory_space<vmem>>, %arg3: memref<256x256xbf16, #tpu.memory_space<vmem>>, %arg4: memref<1x256xf32, #tpu.memory_space<vmem>>, %arg5: memref<256x256xbf16, #tpu.memory_space<vmem>>, %arg6: memref<1x256xf32, #tpu.memory_space<vmem>>, %arg7: memref<256x256xbf16, #tpu.memory_space<vmem>>, %arg8: memref<1x256xf32, #tpu.memory_space<vmem>>, %arg9: memref<1x256xf32, #tpu.memory_space<vmem>>, %arg10: memref<1x1xf32, #tpu.memory_space<vmem>>, %arg11: memref<1x8xf32, #tpu.memory_space<vmem>>) attributes {dimension_semantics = [#tpu.dimension_semantics<parallel>], iteration_bounds = array<i64: 1>, scalar_prefetch = 0 : i64, scratch_operands = 0 : i64, tpu.core_type = #tpu.core_type<tc>, window_params = [{transform_indices = @transform_0, window_bounds = array<i64: 8, 172>}, {transform_indices = @transform_1, window_bounds = array<i64: 8, 1>}, {pipeline_mode = #tpu.pipeline_mode<synchronous>, transform_indices = @transform_2, window_bounds = array<i64: 256, 256>}, {pipeline_mode = #tpu.pipeline_mode<synchronous>, transform_indices = @transform_3, window_bounds = array<i64: 1, 256>}, {pipeline_mode = #tpu.pipeline_mode<synchronous>, transform_indices = @transform_4, window_bounds = array<i64: 256, 256>}, {pipeline_mode = #tpu.pipeline_mode<synchronous>, transform_indices = @transform_5, window_bounds = array<i64: 1, 256>}, {pipeline_mode = #tpu.pipeline_mode<synchronous>, transform_indices = @transform_6, window_bounds = array<i64: 256, 256>}, {pipeline_mode = #tpu.pipeline_mode<synchronous>, transform_indices = @transform_7, window_bounds = array<i64: 1, 256>}, {pipeline_mode = #tpu.pipeline_mode<synchronous>, transform_indices = @transform_8, window_bounds = array<i64: 1, 256>}, {pipeline_mode = #tpu.pipeline_mode<synchronous>, transform_indices = @transform_9, window_bounds = array<i64: 1, 1>}, {transform_indices = @transform_10, window_bounds = array<i64: 1, 8>}]} {
    %c0 = arith.constant 0 : index
    %c0_0 = arith.constant 0 : index
    %0 = vector.load %arg1[%c0, %c0_0] : memref<8x172xf32, #tpu.memory_space<vmem>>, vector<8x172xf32>
    %c0_1 = arith.constant 0 : index
    %c0_2 = arith.constant 0 : index
    %1 = vector.load %arg2[%c0_1, %c0_2] : memref<8x1xi32, #tpu.memory_space<vmem>>, vector<8x1xi32>
    %2 = tpu.iota {dimensions = array<i32: 1>} : vector<8x84xi32>
    %3 = vector.broadcast %1 : vector<8x1xi32> to vector<8x84xi32>
    %4 = arith.cmpi eq, %2, %3 : vector<8x84xi32>
    %5 = arith.extui %4 : vector<8x84xi1> to vector<8x84xi32>
    %6 = arith.sitofp %5 : vector<8x84xi32> to vector<8x84xf32>
    %7 = tpu.concatenate %0, %6 in 1 : vector<8x172xf32>, vector<8x84xf32> -> vector<8x256xf32>
    %8 = arith.truncf %7 : vector<8x256xf32> to vector<8x256xbf16>
    %c0_3 = arith.constant 0 : index
    %c0_4 = arith.constant 0 : index
    %9 = vector.load %arg3[%c0_3, %c0_4] : memref<256x256xbf16, #tpu.memory_space<vmem>>, vector<256x256xbf16>
    %cst = arith.constant dense<0.000000e+00> : vector<8x256xf32>
    %10 = tpu.matmul %8, %9, %cst {dimension_numbers = #tpu.dot_dimension_numbers<[1], [0], [0], [1], [0, 0, 1, 1], [], []>} : vector<8x256xbf16>, vector<256x256xbf16>, vector<8x256xf32> -> vector<8x256xf32>
    %c0_5 = arith.constant 0 : index
    %c0_6 = arith.constant 0 : index
    %11 = vector.load %arg4[%c0_5, %c0_6] : memref<1x256xf32, #tpu.memory_space<vmem>>, vector<1x256xf32>
    %12 = vector.broadcast %11 : vector<1x256xf32> to vector<8x256xf32>
    %13 = arith.addf %10, %12 : vector<8x256xf32>
    %cst_7 = arith.constant 0.000000e+00 : f32
    %14 = vector.broadcast %cst_7 : f32 to vector<8x256xf32>
    %15 = arith.maximumf %13, %14 : vector<8x256xf32>
    %16 = arith.truncf %15 : vector<8x256xf32> to vector<8x256xbf16>
    %c0_8 = arith.constant 0 : index
    %c0_9 = arith.constant 0 : index
    %17 = vector.load %arg5[%c0_8, %c0_9] : memref<256x256xbf16, #tpu.memory_space<vmem>>, vector<256x256xbf16>
    %cst_10 = arith.constant dense<0.000000e+00> : vector<8x256xf32>
    %18 = tpu.matmul %16, %17, %cst_10 {dimension_numbers = #tpu.dot_dimension_numbers<[1], [0], [0], [1], [0, 0, 1, 1], [], []>} : vector<8x256xbf16>, vector<256x256xbf16>, vector<8x256xf32> -> vector<8x256xf32>
    %c0_11 = arith.constant 0 : index
    %c0_12 = arith.constant 0 : index
    %19 = vector.load %arg6[%c0_11, %c0_12] : memref<1x256xf32, #tpu.memory_space<vmem>>, vector<1x256xf32>
    %20 = vector.broadcast %19 : vector<1x256xf32> to vector<8x256xf32>
    %21 = arith.addf %18, %20 : vector<8x256xf32>
    %cst_13 = arith.constant 0.000000e+00 : f32
    %22 = vector.broadcast %cst_13 : f32 to vector<8x256xf32>
    %23 = arith.maximumf %21, %22 : vector<8x256xf32>
    %24 = arith.truncf %23 : vector<8x256xf32> to vector<8x256xbf16>
    %c0_14 = arith.constant 0 : index
    %c0_15 = arith.constant 0 : index
    %25 = vector.load %arg7[%c0_14, %c0_15] : memref<256x256xbf16, #tpu.memory_space<vmem>>, vector<256x256xbf16>
    %cst_16 = arith.constant dense<0.000000e+00> : vector<8x256xf32>
    %26 = tpu.matmul %24, %25, %cst_16 {dimension_numbers = #tpu.dot_dimension_numbers<[1], [0], [0], [1], [0, 0, 1, 1], [], []>} : vector<8x256xbf16>, vector<256x256xbf16>, vector<8x256xf32> -> vector<8x256xf32>
    %c0_17 = arith.constant 0 : index
    %c0_18 = arith.constant 0 : index
    %27 = vector.load %arg8[%c0_17, %c0_18] : memref<1x256xf32, #tpu.memory_space<vmem>>, vector<1x256xf32>
    %28 = vector.broadcast %27 : vector<1x256xf32> to vector<8x256xf32>
    %29 = arith.addf %26, %28 : vector<8x256xf32>
    %cst_19 = arith.constant 0.000000e+00 : f32
    %30 = vector.broadcast %cst_19 : f32 to vector<8x256xf32>
    %31 = arith.maximumf %29, %30 : vector<8x256xf32>
    %c0_20 = arith.constant 0 : index
    %c0_21 = arith.constant 0 : index
    %32 = vector.load %arg9[%c0_20, %c0_21] : memref<1x256xf32, #tpu.memory_space<vmem>>, vector<1x256xf32>
    %33 = vector.broadcast %32 : vector<1x256xf32> to vector<8x256xf32>
    %34 = arith.mulf %31, %33 : vector<8x256xf32>
    %cst_22 = arith.constant dense<0.000000e+00> : vector<8xf32>
    %35 = vector.multi_reduction <add>, %34, %cst_22 [1] : vector<8x256xf32> to vector<8xf32>
    %36 = vector.shape_cast %35 : vector<8xf32> to vector<8x1xf32>
    %c0_23 = arith.constant 0 : index
    %c0_24 = arith.constant 0 : index
    %37 = vector.load %arg10[%c0_23, %c0_24] : memref<1x1xf32, #tpu.memory_space<vmem>>, vector<1x1xf32>
    %38 = vector.broadcast %37 : vector<1x1xf32> to vector<8x1xf32>
    %39 = arith.addf %36, %38 : vector<8x1xf32>
    %40 = tpu.transpose %39, [1, 0] : vector<8x1xf32> -> vector<1x8xf32>
    %c0_25 = arith.constant 0 : index
    %c0_26 = arith.constant 0 : index
    %41 = vector.load %arg11[%c0_25, %c0_26] : memref<1x8xf32, #tpu.memory_space<vmem>>, vector<1x8xf32>
    tpu.vector_store %arg11[%c0_25, %c0_26], %40 {strides = array<i32>} : memref<1x8xf32, #tpu.memory_space<vmem>>, vector<1x8xf32>,
    return
  }
  func.func @transform_0(%arg0: i32) -> (i32, i32) {
    %c0_i32 = arith.constant 0 : i32
    %c0_i32_0 = arith.constant 0 : i32
    return %arg0, %c0_i32 : i32, i32
  }
  func.func @transform_1(%arg0: i32) -> (i32, i32) {
    %c0_i32 = arith.constant 0 : i32
    %c0_i32_0 = arith.constant 0 : i32
    return %arg0, %c0_i32 : i32, i32
  }
  func.func @transform_2(%arg0: i32) -> (i32, i32) {
    %c0_i32 = arith.constant 0 : i32
    %c0_i32_0 = arith.constant 0 : i32
    %c0_i32_1 = arith.constant 0 : i32
    return %c0_i32, %c0_i32_0 : i32, i32
  }
  func.func @transform_3(%arg0: i32) -> (i32, i32) {
    %c0_i32 = arith.constant 0 : i32
    %c0_i32_0 = arith.constant 0 : i32
    %c0_i32_1 = arith.constant 0 : i32
    return %c0_i32, %c0_i32_0 : i32, i32
  }
  func.func @transform_4(%arg0: i32) -> (i32, i32) {
    %c0_i32 = arith.constant 0 : i32
    %c0_i32_0 = arith.constant 0 : i32
    %c0_i32_1 = arith.constant 0 : i32
    return %c0_i32, %c0_i32_0 : i32, i32
  }
  func.func @transform_5(%arg0: i32) -> (i32, i32) {
    %c0_i32 = arith.constant 0 : i32
    %c0_i32_0 = arith.constant 0 : i32
    %c0_i32_1 = arith.constant 0 : i32
    return %c0_i32, %c0_i32_0 : i32, i32
  }
  func.func @transform_6(%arg0: i32) -> (i32, i32) {
    %c0_i32 = arith.constant 0 : i32
    %c0_i32_0 = arith.constant 0 : i32
    %c0_i32_1 = arith.constant 0 : i32
    return %c0_i32, %c0_i32_0 : i32, i32
  }
  func.func @transform_7(%arg0: i32) -> (i32, i32) {
    %c0_i32 = arith.constant 0 : i32
    %c0_i32_0 = arith.constant 0 : i32
    %c0_i32_1 = arith.constant 0 : i32
    return %c0_i32, %c0_i32_0 : i32, i32
  }
  func.func @transform_8(%arg0: i32) -> (i32, i32) {
    %c0_i32 = arith.constant 0 : i32
    %c0_i32_0 = arith.constant 0 : i32
    %c0_i32_1 = arith.constant 0 : i32
    return %c0_i32, %c0_i32_0 : i32, i32
  }
  func.func @transform_9(%arg0: i32) -> (i32, i32) {
    %c0_i32 = arith.constant 0 : i32
    %c0_i32_0 = arith.constant 0 : i32
    %c0_i32_1 = arith.constant 0 : i32
    return %c0_i32, %c0_i32_0 : i32, i32
  }
  func.func @transform_10(%arg0: i32) -> (i32, i32) {
    %c0_i32 = arith.constant 0 : i32
    %c0_i32_0 = arith.constant 0 : i32
    return %arg0, %c0_i32 : i32, i32
  }
}

</mosaic_0001>

<llo_original>
// kernel: kitty_forward.1
$region0: #{kitty_forward.1}
  #allocation0 [shape = 'u32[]', space=smem, size = 0x4, offset = 0x4, fixed_abs, tag = 'smem constant byte address 0x4 - core index']
  #allocation1 [shape = 'u32[72,128]{1,0:T(1,128)}', space=vmem, size = 0x9000, scoped, tag = 'internal scratch']
  #allocation2 [shape = 'f32[1,1]{1,0:T(1,128)S(1)}', space=vmem, size = 0x200, scoped, tag = 'scoped memory for kitty_forward.1']
  %s0 = inlined_call_operand.hbm [shape: f32[8,172], index: 0, kind: input, shape index: {}]
  %s1 = inlined_call_operand.vmem [shape: s32[8,1], index: 1, kind: input, shape index: {}]
  %s2 = inlined_call_operand.hbm [shape: bf16[256,256], index: 2, kind: input, shape index: {}]
  %s3 = inlined_call_operand.vmem [shape: f32[1,256], index: 3, kind: input, shape index: {}]
  %s4 = inlined_call_operand.hbm [shape: bf16[256,256], index: 4, kind: input, shape index: {}]
  %s5 = inlined_call_operand.vmem [shape: f32[1,256], index: 5, kind: input, shape index: {}]
  %s6 = inlined_call_operand.hbm [shape: bf16[256,256], index: 6, kind: input, shape index: {}]
  %s7 = inlined_call_operand.vmem [shape: f32[1,256], index: 7, kind: input, shape index: {}]
  %s8 = inlined_call_operand.vmem [shape: f32[1,256], index: 8, kind: input, shape index: {}]
  %s9 = inlined_call_operand.<no memory space> [shape: f32[1,1], index: 9, kind: input, shape index: {}]
  %s10 = inlined_call_operand.hbm [shape: f32[1,8], index: 10, kind: output, shape index: {}]
  %s11 = sld [smem:[#allocation0]]
  $region66: #{kitty_forward.1} parent=0
    _
  %s13 = ssub.s32 1, %s11
  %s14 = scalar_select 0, %s13, %s11
  %v15 = vstv %s9
  %16 = vst [vmem:[#allocation2] sm:$0x1] %v15
  $region1: #{kitty_forward.1} parent=0
    #allocation3 [shape = 'u8[8192]{0}', space=vmem, size = 0x2000, scoped, tag = 'input window, operand 0, single buffered']
    #allocation4 [shape = 's32[1]{0}', space=sflag, size = 0x4, scoped, tag = 'scoped memory for kitty_forward.1']
    #allocation5 [shape = 's32[1]{0}', space=sflag, size = 0x4, scoped, tag = 'scoped memory for kitty_forward.1']
    #allocation6 [shape = 'u8[131072]{0}', space=vmem, size = 0x20000, scoped, tag = 'input window, operand 2, single buffered']
    #allocation7 [shape = 's32[1]{0}', space=sflag, size = 0x4, scoped, tag = 'scoped memory for kitty_forward.1']
    #allocation8 [shape = 'u8[131072]{0}', space=vmem, size = 0x20000, scoped, tag = 'input window, operand 4, single buffered']
    #allocation9 [shape = 'u8[131072]{0}', space=vmem, size = 0x20000, scoped, tag = 'input window, operand 6, single buffered']
    #allocation10 [shape = 's32[1]{0}', space=sflag, size = 0x4, scoped, tag = 'scoped memory for kitty_forward.1']
    #allocation11 [shape = 'u8[512]{0}', space=vmem, size = 0x400, scoped, tag = 'output window, operand 0, single buffered']
    %17 = vsyncpa [#allocation4], 0
    %18 = vsyncpa [#allocation7], 0
    %19 = vsyncpa [#allocation10], 0
    %20 = vsyncpa [#allocation5], 0
    // Predicated region
    $region2: #{kitty_forward.1} parent=1 // pred_check
      _
    $region3: #{kitty_forward.1} parent=1 // pred_check_branch
      %22 = sbr.rel (0) target = $region5
    $region4: #{kitty_forward.1} parent=1 // pred_region
      %24 = vsyncadd [#allocation4], 0
      %s26 = sshll.u32 %s0, 4
      %s27 = int_to_ptr.hbm [resolvable:$true] %s26
      %s28 = sshll.u32 [#allocation3], 4
      %s29 = int_to_ptr.vmem [resolvable:$true] %s28
      %31 = dma.hbm_to_vmem [thread:$0]  %s27, 256, %s29, [#allocation4]
    $region5: #{kitty_forward.1} parent=1 // pred_fallthru
      _
    // Predicated region
    $region6: #{kitty_forward.1} parent=1 // pred_check
      _
    $region7: #{kitty_forward.1} parent=1 // pred_check_branch
      %33 = sbr.rel (0) target = $region9
    $region8: #{kitty_forward.1} parent=1 // pred_region
      _
    $region9: #{kitty_forward.1} parent=1 // pred_fallthru
      _
    // Predicated region
    $region10: #{kitty_forward.1} parent=1 // pred_check
      _
    $region11: #{kitty_forward.1} parent=1 // pred_check_branch
      %35 = sbr.rel (0) target = $region13
    $region12: #{kitty_forward.1} parent=1 // pred_region
      %37 = vsyncadd [#allocation7], 0
      %s38 = sshll.u32 %s2, 4
      %s39 = int_to_ptr.hbm [resolvable:$true] %s38
      %s40 = sshll.u32 [#allocation6], 4
      %s41 = int_to_ptr.vmem [resolvable:$true] %s40
      %46 = dma.hbm_to_vmem [thread:$0]  %s39, 4096, %s41, [#allocation7], 128, 128, 8
    $region13: #{kitty_forward.1} parent=1 // pred_fallthru
      _
    // Predicated region
    $region14: #{kitty_forward.1} parent=1 // pred_check
      _
    $region15: #{kitty_forward.1} parent=1 // pred_check_branch
      %48 = sbr.rel (0) target = $region17
    $region16: #{kitty_forward.1} parent=1 // pred_region
      _
    $region17: #{kitty_forward.1} parent=1 // pred_fallthru
      _
    // Predicated region
    $region18: #{kitty_forward.1} parent=1 // pred_check
      _
    $region19: #{kitty_forward.1} parent=1 // pred_check_branch
      %50 = sbr.rel (0) target = $region21
    $region20: #{kitty_forward.1} parent=1 // pred_region
      %52 = vsyncadd [#allocation7], 0
      %s53 = sshll.u32 %s4, 4
      %s54 = int_to_ptr.hbm [resolvable:$true] %s53
      %s55 = sshll.u32 [#allocation8], 4
      %s56 = int_to_ptr.vmem [resolvable:$true] %s55
      %61 = dma.hbm_to_vmem [thread:$0]  %s54, 4096, %s56, [#allocation7], 128, 128, 8
    $region21: #{kitty_forward.1} parent=1 // pred_fallthru
      _
    // Predicated region
    $region22: #{kitty_forward.1} parent=1 // pred_check
      _
    $region23: #{kitty_forward.1} parent=1 // pred_check_branch
      %63 = sbr.rel (0) target = $region25
    $region24: #{kitty_forward.1} parent=1 // pred_region
      _
    $region25: #{kitty_forward.1} parent=1 // pred_fallthru
      _
    // Predicated region
    $region26: #{kitty_forward.1} parent=1 // pred_check
      _
    $region27: #{kitty_forward.1} parent=1 // pred_check_branch
      %65 = sbr.rel (0) target = $region29
    $region28: #{kitty_forward.1} parent=1 // pred_region
      %67 = vsyncadd [#allocation10], 0
      %s68 = sshll.u32 %s6, 4
      %s69 = int_to_ptr.hbm [resolvable:$true] %s68
      %s70 = sshll.u32 [#allocation9], 4
      %s71 = int_to_ptr.vmem [resolvable:$true] %s70
      %76 = dma.hbm_to_vmem [thread:$0]  %s69, 4096, %s71, [#allocation10], 128, 128, 8
    $region29: #{kitty_forward.1} parent=1 // pred_fallthru
      _
    // Predicated region
    $region30: #{kitty_forward.1} parent=1 // pred_check
      _
    $region31: #{kitty_forward.1} parent=1 // pred_check_branch
      %78 = sbr.rel (0) target = $region33
    $region32: #{kitty_forward.1} parent=1 // pred_region
      _
    $region33: #{kitty_forward.1} parent=1 // pred_fallthru
      _
    // Predicated region
    $region34: #{kitty_forward.1} parent=1 // pred_check
      _
    $region35: #{kitty_forward.1} parent=1 // pred_check_branch
      %80 = sbr.rel (0) target = $region37
    $region36: #{kitty_forward.1} parent=1 // pred_region
      _
    $region37: #{kitty_forward.1} parent=1 // pred_fallthru
      _
    // Predicated region
    $region38: #{kitty_forward.1} parent=1 // pred_check
      _
    $region39: #{kitty_forward.1} parent=1 // pred_check_branch
      %82 = sbr.rel (0) target = $region41
    $region40: #{kitty_forward.1} parent=1 // pred_region
      _
    $region41: #{kitty_forward.1} parent=1 // pred_fallthru
      _
    // Predicated region
    $region42: #{kitty_forward.1} parent=1 // pred_check
      _
    $region43: #{kitty_forward.1} parent=1 // pred_check_branch
      %84 = sbr.rel (0) target = $region45
    $region44: #{kitty_forward.1} parent=1 // pred_region
      %86 = dma.done [#allocation4], 256
    $region45: #{kitty_forward.1} parent=1 // pred_fallthru
      _
    // Predicated region
    $region46: #{kitty_forward.1} parent=1 // pred_check
      _
    $region47: #{kitty_forward.1} parent=1 // pred_check_branch
      %88 = sbr.rel (0) target = $region49
    $region48: #{kitty_forward.1} parent=1 // pred_region
      %90 = dma.done [#allocation7], 4096
    $region49: #{kitty_forward.1} parent=1 // pred_fallthru
      _
    // Predicated region
    $region50: #{kitty_forward.1} parent=1 // pred_check
      _
    $region51: #{kitty_forward.1} parent=1 // pred_check_branch
      %92 = sbr.rel (0) target = $region53
    $region52: #{kitty_forward.1} parent=1 // pred_region
      %94 = dma.done [#allocation7], 4096
    $region53: #{kitty_forward.1} parent=1 // pred_fallthru
      _
    // Predicated region
    $region54: #{kitty_forward.1} parent=1 // pred_check
      _
    $region55: #{kitty_forward.1} parent=1 // pred_check_branch
      %96 = sbr.rel (0) target = $region57
    $region56: #{kitty_forward.1} parent=1 // pred_region
      %98 = dma.done [#allocation10], 4096
    $region57: #{kitty_forward.1} parent=1 // pred_fallthru
      _
    %v99 = vld [vmem:[#allocation3] sm:$0xff]
    %v100 = vld [vmem:[#allocation3 + $0x8] sm:$0xff]
    %v101 = vld [vmem:[%s1] sm:$0xff]
    %v102 = vlaneseq
    %v103 = vand.u32 %v102, 127
    %104 = vset.pattern.permute.xlu0 0
    %105 = vperm.xlu0 %104, %v101
    %v106 = vpop.permute.xlu0 %105
    %vm107 = vcmp.eq.s32.totalorder %v103, %v106
    %v108 = vsel %vm107, 1, 0
    %v109 = vcvt.s32.f32 %v108
    %111 = vrot.lane.b32.xlu0 %v109, 44
    %v112 = vpop.permute.xlu0 %111
    %vm114 = vcmask 359424
    %v115 = vsel %vm114, %v100, %v112
    %v116 = vpack.c.bf16 %v99, %v99
    %v117 = vpack.c.bf16 %v115, %v115
    %v118 = vld [vmem:[#allocation6] sm:$0xff]
    %v119 = vld [vmem:[#allocation6 + $0x8] sm:$0xff]
    %v120 = vld [vmem:[#allocation6 + $0x10] sm:$0xff]
    %v121 = vld [vmem:[#allocation6 + $0x18] sm:$0xff]
    %v122 = vld [vmem:[#allocation6 + $0x20] sm:$0xff]
    %v123 = vld [vmem:[#allocation6 + $0x28] sm:$0xff]
    %v124 = vld [vmem:[#allocation6 + $0x30] sm:$0xff]
    %v125 = vld [vmem:[#allocation6 + $0x38] sm:$0xff]
    %v126 = vld [vmem:[#allocation6 + $0x40] sm:$0xff]
    %v127 = vld [vmem:[#allocation6 + $0x48] sm:$0xff]
    %v128 = vld [vmem:[#allocation6 + $0x50] sm:$0xff]
    %v129 = vld [vmem:[#allocation6 + $0x58] sm:$0xff]
    %v130 = vld [vmem:[#allocation6 + $0x60] sm:$0xff]
    %v131 = vld [vmem:[#allocation6 + $0x68] sm:$0xff]
    %v132 = vld [vmem:[#allocation6 + $0x70] sm:$0xff]
    %v133 = vld [vmem:[#allocation6 + $0x78] sm:$0xff]
    %v134 = vld [vmem:[#allocation6 + $0x80] sm:$0xff]
    %v135 = vld [vmem:[#allocation6 + $0x88] sm:$0xff]
    %v136 = vld [vmem:[#allocation6 + $0x90] sm:$0xff]
    %v137 = vld [vmem:[#allocation6 + $0x98] sm:$0xff]
    %v138 = vld [vmem:[#allocation6 + $0xa0] sm:$0xff]
    %v139 = vld [vmem:[#allocation6 + $0xa8] sm:$0xff]
    %v140 = vld [vmem:[#allocation6 + $0xb0] sm:$0xff]
    %v141 = vld [vmem:[#allocation6 + $0xb8] sm:$0xff]
    %v142 = vld [vmem:[#allocation6 + $0xc0] sm:$0xff]
    %v143 = vld [vmem:[#allocation6 + $0xc8] sm:$0xff]
    %v144 = vld [vmem:[#allocation6 + $0xd0] sm:$0xff]
    %v145 = vld [vmem:[#allocation6 + $0xd8] sm:$0xff]
    %v146 = vld [vmem:[#allocation6 + $0xe0] sm:$0xff]
    %v147 = vld [vmem:[#allocation6 + $0xe8] sm:$0xff]
    %v148 = vld [vmem:[#allocation6 + $0xf0] sm:$0xff]
    %v149 = vld [vmem:[#allocation6 + $0xf8] sm:$0xff]
    %v150 = vld [vmem:[%s3] sm:$0x3]
    %v152 = vperm.slane %v150, 0
    %v153 = vperm.slane %v150, 1
    %v188 = vunpack.c.l.b16 %v118
    %v189 = vunpack.c.h.b16 %v118
    %v190 = vunpack.c.l.b16 %v119
    %v191 = vunpack.c.h.b16 %v119
    %v192 = vunpack.c.l.b16 %v120
    %v193 = vunpack.c.h.b16 %v120
    %v194 = vunpack.c.l.b16 %v121
    %v195 = vunpack.c.h.b16 %v121
    %v196 = vunpack.c.l.b16 %v122
    %v197 = vunpack.c.h.b16 %v122
    %v198 = vunpack.c.l.b16 %v123
    %v199 = vunpack.c.h.b16 %v123
    %v200 = vunpack.c.l.b16 %v124
    %v201 = vunpack.c.h.b16 %v124
    %v202 = vunpack.c.l.b16 %v125
    %v203 = vunpack.c.h.b16 %v125
    %v204 = vunpack.c.l.b16 %v126
    %v205 = vunpack.c.h.b16 %v126
    %v206 = vunpack.c.l.b16 %v127
    %v207 = vunpack.c.h.b16 %v127
    %v208 = vunpack.c.l.b16 %v128
    %v209 = vunpack.c.h.b16 %v128
    %v210 = vunpack.c.l.b16 %v129
    %v211 = vunpack.c.h.b16 %v129
    %v212 = vunpack.c.l.b16 %v130
    %v213 = vunpack.c.h.b16 %v130
    %v214 = vunpack.c.l.b16 %v131
    %v215 = vunpack.c.h.b16 %v131
    %v216 = vunpack.c.l.b16 %v132
    %v217 = vunpack.c.h.b16 %v132
    %v218 = vunpack.c.l.b16 %v133
    %v219 = vunpack.c.h.b16 %v133
    %v220 = vunpack.c.l.b16 %v134
    %v221 = vunpack.c.h.b16 %v134
    %v222 = vunpack.c.l.b16 %v135
    %v223 = vunpack.c.h.b16 %v135
    %v224 = vunpack.c.l.b16 %v136
    %v225 = vunpack.c.h.b16 %v136
    %v226 = vunpack.c.l.b16 %v137
    %v227 = vunpack.c.h.b16 %v137
    %v228 = vunpack.c.l.b16 %v138
    %v229 = vunpack.c.h.b16 %v138
    %v230 = vunpack.c.l.b16 %v139
    %v231 = vunpack.c.h.b16 %v139
    %v232 = vunpack.c.l.b16 %v140
    %v233 = vunpack.c.h.b16 %v140
    %v234 = vunpack.c.l.b16 %v141
    %v235 = vunpack.c.h.b16 %v141
    %v236 = vunpack.c.l.b16 %v142
    %v237 = vunpack.c.h.b16 %v142
    %v238 = vunpack.c.l.b16 %v143
    %v239 = vunpack.c.h.b16 %v143
    %v240 = vunpack.c.l.b16 %v144
    %v241 = vunpack.c.h.b16 %v144
    %v242 = vunpack.c.l.b16 %v145
    %v243 = vunpack.c.h.b16 %v145
    %v244 = vunpack.c.l.b16 %v146
    %v245 = vunpack.c.h.b16 %v146
    %v246 = vunpack.c.l.b16 %v147
    %v247 = vunpack.c.h.b16 %v147
    %v248 = vunpack.c.l.b16 %v148
    %v249 = vunpack.c.h.b16 %v148
    %v250 = vunpack.c.l.b16 %v149
    %v251 = vunpack.c.h.b16 %v149
    %v252 = vpack.c.b16 %v190, %v188
    %v253 = vpack.c.b16 %v191, %v189
    %v254 = vpack.c.b16 %v194, %v192
    %v255 = vpack.c.b16 %v195, %v193
    %v256 = vpack.c.b16 %v198, %v196
    %v257 = vpack.c.b16 %v199, %v197
    %v258 = vpack.c.b16 %v202, %v200
    %v259 = vpack.c.b16 %v203, %v201
    %v260 = vpack.c.b16 %v206, %v204
    %v261 = vpack.c.b16 %v207, %v205
    %v262 = vpack.c.b16 %v210, %v208
    %v263 = vpack.c.b16 %v211, %v209
    %v264 = vpack.c.b16 %v214, %v212
    %v265 = vpack.c.b16 %v215, %v213
    %v266 = vpack.c.b16 %v218, %v216
    %v267 = vpack.c.b16 %v219, %v217
    %v268 = vpack.c.b16 %v222, %v220
    %v269 = vpack.c.b16 %v223, %v221
    %v270 = vpack.c.b16 %v226, %v224
    %v271 = vpack.c.b16 %v227, %v225
    %v272 = vpack.c.b16 %v230, %v228
    %v273 = vpack.c.b16 %v231, %v229
    %v274 = vpack.c.b16 %v234, %v232
    %v275 = vpack.c.b16 %v235, %v233
    %v276 = vpack.c.b16 %v238, %v236
    %v277 = vpack.c.b16 %v239, %v237
    %v278 = vpack.c.b16 %v242, %v240
    %v279 = vpack.c.b16 %v243, %v241
    %v280 = vpack.c.b16 %v246, %v244
    %v281 = vpack.c.b16 %v247, %v245
    %v282 = vpack.c.b16 %v250, %v248
    %v283 = vpack.c.b16 %v251, %v249
    %316 = vmatpush.bf16.msra.mxu0 %v266
    %317 = vmatpush.bf16.msra.mxu0 %v264
    %318 = vmatpush.bf16.msra.mxu0 %v262
    %319 = vmatpush.bf16.msra.mxu0 %v260
    %320 = vmatpush.bf16.msra.mxu0 %v258
    %321 = vmatpush.bf16.msra.mxu0 %v256
    %322 = vmatpush.bf16.msra.mxu0 %v254
    %323 = vmatpush.bf16.msra.mxu0 %v252
    %324 = vmatmul.bf16.gmra.mxu0 %v116
    %v325 = vpop.f32.mrf.mxu0
    %v326 = vadd.f32 %v152, %v325
    %v327 = vpop.f32.mrf.mxu0
    %328 = vdwg.mxu0
    %329 = vmatpush.bf16.msra.mxu0 %v282
    %330 = vmatpush.bf16.msra.mxu0 %v280
    %331 = vmatpush.bf16.msra.mxu0 %v278
    %332 = vmatpush.bf16.msra.mxu0 %v276
    %333 = vmatpush.bf16.msra.mxu0 %v274
    %334 = vmatpush.bf16.msra.mxu0 %v272
    %335 = vmatpush.bf16.msra.mxu0 %v270
    %336 = vmatpush.bf16.msra.mxu0 %v268
    %337 = vmatmul.bf16.gmra.mxu0 %v117
    %v338 = vpop.f32.mrf.mxu0
    %v339 = vadd.f32 %v326, %v338
    %v340 = vpop.f32.mrf.mxu0
    %341 = vdwg.mxu0
    %342 = vmatpush.bf16.msra.mxu0 %v267
    %343 = vmatpush.bf16.msra.mxu0 %v265
    %344 = vmatpush.bf16.msra.mxu0 %v263
    %345 = vmatpush.bf16.msra.mxu0 %v261
    %346 = vmatpush.bf16.msra.mxu0 %v259
    %347 = vmatpush.bf16.msra.mxu0 %v257
    %348 = vmatpush.bf16.msra.mxu0 %v255
    %349 = vmatpush.bf16.msra.mxu0 %v253
    %350 = vmatmul.bf16.gmra.mxu0 %v116
    %v351 = vpop.f32.mrf.mxu0
    %v352 = vadd.f32 %v153, %v351
    %v353 = vpop.f32.mrf.mxu0
    %354 = vdwg.mxu0
    %355 = vmatpush.bf16.msra.mxu0 %v283
    %356 = vmatpush.bf16.msra.mxu0 %v281
    %357 = vmatpush.bf16.msra.mxu0 %v279
    %358 = vmatpush.bf16.msra.mxu0 %v277
    %359 = vmatpush.bf16.msra.mxu0 %v275
    %360 = vmatpush.bf16.msra.mxu0 %v273
    %361 = vmatpush.bf16.msra.mxu0 %v271
    %362 = vmatpush.bf16.msra.mxu0 %v269
    %363 = vmatmul.bf16.gmra.mxu0 %v117
    %v364 = vpop.f32.mrf.mxu0
    %v365 = vadd.f32 %v352, %v364
    %v366 = vpop.f32.mrf.mxu0
    %367 = vdwg.mxu0
    %v368 = vmax.f32 %v339, 0.0
    %v369 = vmax.f32 %v365, 0.0
    %v370 = vpack.c.bf16 %v368, %v368
    %v371 = vpack.c.bf16 %v369, %v369
    %v372 = vld [vmem:[#allocation8] sm:$0xff]
    %v373 = vld [vmem:[#allocation8 + $0x8] sm:$0xff]
    %v374 = vld [vmem:[#allocation8 + $0x10] sm:$0xff]
    %v375 = vld [vmem:[#allocation8 + $0x18] sm:$0xff]
    %v376 = vld [vmem:[#allocation8 + $0x20] sm:$0xff]
    %v377 = vld [vmem:[#allocation8 + $0x28] sm:$0xff]
    %v378 = vld [vmem:[#allocation8 + $0x30] sm:$0xff]
    %v379 = vld [vmem:[#allocation8 + $0x38] sm:$0xff]
    %v380 = vld [vmem:[#allocation8 + $0x40] sm:$0xff]
    %v381 = vld [vmem:[#allocation8 + $0x48] sm:$0xff]
    %v382 = vld [vmem:[#allocation8 + $0x50] sm:$0xff]
    %v383 = vld [vmem:[#allocation8 + $0x58] sm:$0xff]
    %v384 = vld [vmem:[#allocation8 + $0x60] sm:$0xff]
    %v385 = vld [vmem:[#allocation8 + $0x68] sm:$0xff]
    %v386 = vld [vmem:[#allocation8 + $0x70] sm:$0xff]
    %v387 = vld [vmem:[#allocation8 + $0x78] sm:$0xff]
    %v388 = vld [vmem:[#allocation8 + $0x80] sm:$0xff]
    %v389 = vld [vmem:[#allocation8 + $0x88] sm:$0xff]
    %v390 = vld [vmem:[#allocation8 + $0x90] sm:$0xff]
    %v391 = vld [vmem:[#allocation8 + $0x98] sm:$0xff]
    %v392 = vld [vmem:[#allocation8 + $0xa0] sm:$0xff]
    %v393 = vld [vmem:[#allocation8 + $0xa8] sm:$0xff]
    %v394 = vld [vmem:[#allocation8 + $0xb0] sm:$0xff]
    %v395 = vld [vmem:[#allocation8 + $0xb8] sm:$0xff]
    %v396 = vld [vmem:[#allocation8 + $0xc0] sm:$0xff]
    %v397 = vld [vmem:[#allocation8 + $0xc8] sm:$0xff]
    %v398 = vld [vmem:[#allocation8 + $0xd0] sm:$0xff]
    %v399 = vld [vmem:[#allocation8 + $0xd8] sm:$0xff]
    %v400 = vld [vmem:[#allocation8 + $0xe0] sm:$0xff]
    %v401 = vld [vmem:[#allocation8 + $0xe8] sm:$0xff]
    %v402 = vld [vmem:[#allocation8 + $0xf0] sm:$0xff]
    %v403 = vld [vmem:[#allocation8 + $0xf8] sm:$0xff]
    %v404 = vld [vmem:[%s5] sm:$0x3]
    %v406 = vperm.slane %v404, 0
    %v407 = vperm.slane %v404, 1
    %v442 = vunpack.c.l.b16 %v372
    %v443 = vunpack.c.h.b16 %v372
    %v444 = vunpack.c.l.b16 %v373
    %v445 = vunpack.c.h.b16 %v373
    %v446 = vunpack.c.l.b16 %v374
    %v447 = vunpack.c.h.b16 %v374
    %v448 = vunpack.c.l.b16 %v375
    %v449 = vunpack.c.h.b16 %v375
    %v450 = vunpack.c.l.b16 %v376
    %v451 = vunpack.c.h.b16 %v376
    %v452 = vunpack.c.l.b16 %v377
    %v453 = vunpack.c.h.b16 %v377
    %v454 = vunpack.c.l.b16 %v378
    %v455 = vunpack.c.h.b16 %v378
    %v456 = vunpack.c.l.b16 %v379
    %v457 = vunpack.c.h.b16 %v379
    %v458 = vunpack.c.l.b16 %v380
    %v459 = vunpack.c.h.b16 %v380
    %v460 = vunpack.c.l.b16 %v381
    %v461 = vunpack.c.h.b16 %v381
    %v462 = vunpack.c.l.b16 %v382
    %v463 = vunpack.c.h.b16 %v382
    %v464 = vunpack.c.l.b16 %v383
    %v465 = vunpack.c.h.b16 %v383
    %v466 = vunpack.c.l.b16 %v384
    %v467 = vunpack.c.h.b16 %v384
    %v468 = vunpack.c.l.b16 %v385
    %v469 = vunpack.c.h.b16 %v385
    %v470 = vunpack.c.l.b16 %v386
    %v471 = vunpack.c.h.b16 %v386
    %v472 = vunpack.c.l.b16 %v387
    %v473 = vunpack.c.h.b16 %v387
    %v474 = vunpack.c.l.b16 %v388
    %v475 = vunpack.c.h.b16 %v388
    %v476 = vunpack.c.l.b16 %v389
    %v477 = vunpack.c.h.b16 %v389
    %v478 = vunpack.c.l.b16 %v390
    %v479 = vunpack.c.h.b16 %v390
    %v480 = vunpack.c.l.b16 %v391
    %v481 = vunpack.c.h.b16 %v391
    %v482 = vunpack.c.l.b16 %v392
    %v483 = vunpack.c.h.b16 %v392
    %v484 = vunpack.c.l.b16 %v393
    %v485 = vunpack.c.h.b16 %v393
    %v486 = vunpack.c.l.b16 %v394
    %v487 = vunpack.c.h.b16 %v394
    %v488 = vunpack.c.l.b16 %v395
    %v489 = vunpack.c.h.b16 %v395
    %v490 = vunpack.c.l.b16 %v396
    %v491 = vunpack.c.h.b16 %v396
    %v492 = vunpack.c.l.b16 %v397
    %v493 = vunpack.c.h.b16 %v397
    %v494 = vunpack.c.l.b16 %v398
    %v495 = vunpack.c.h.b16 %v398
    %v496 = vunpack.c.l.b16 %v399
    %v497 = vunpack.c.h.b16 %v399
    %v498 = vunpack.c.l.b16 %v400
    %v499 = vunpack.c.h.b16 %v400
    %v500 = vunpack.c.l.b16 %v401
    %v501 = vunpack.c.h.b16 %v401
    %v502 = vunpack.c.l.b16 %v402
    %v503 = vunpack.c.h.b16 %v402
    %v504 = vunpack.c.l.b16 %v403
    %v505 = vunpack.c.h.b16 %v403
    %v506 = vpack.c.b16 %v444, %v442
    %v507 = vpack.c.b16 %v445, %v443
    %v508 = vpack.c.b16 %v448, %v446
    %v509 = vpack.c.b16 %v449, %v447
    %v510 = vpack.c.b16 %v452, %v450
    %v511 = vpack.c.b16 %v453, %v451
    %v512 = vpack.c.b16 %v456, %v454
    %v513 = vpack.c.b16 %v457, %v455
    %v514 = vpack.c.b16 %v460, %v458
    %v515 = vpack.c.b16 %v461, %v459
    %v516 = vpack.c.b16 %v464, %v462
    %v517 = vpack.c.b16 %v465, %v463
    %v518 = vpack.c.b16 %v468, %v466
    %v519 = vpack.c.b16 %v469, %v467
    %v520 = vpack.c.b16 %v472, %v470
    %v521 = vpack.c.b16 %v473, %v471
    %v522 = vpack.c.b16 %v476, %v474
    %v523 = vpack.c.b16 %v477, %v475
    %v524 = vpack.c.b16 %v480, %v478
    %v525 = vpack.c.b16 %v481, %v479
    %v526 = vpack.c.b16 %v484, %v482
    %v527 = vpack.c.b16 %v485, %v483
    %v528 = vpack.c.b16 %v488, %v486
    %v529 = vpack.c.b16 %v489, %v487
    %v530 = vpack.c.b16 %v492, %v490
    %v531 = vpack.c.b16 %v493, %v491
    %v532 = vpack.c.b16 %v496, %v494
    %v533 = vpack.c.b16 %v497, %v495
    %v534 = vpack.c.b16 %v500, %v498
    %v535 = vpack.c.b16 %v501, %v499
    %v536 = vpack.c.b16 %v504, %v502
    %v537 = vpack.c.b16 %v505, %v503
    %570 = vmatpush.bf16.msra.mxu0 %v520
    %571 = vmatpush.bf16.msra.mxu0 %v518
    %572 = vmatpush.bf16.msra.mxu0 %v516
    %573 = vmatpush.bf16.msra.mxu0 %v514
    %574 = vmatpush.bf16.msra.mxu0 %v512
    %575 = vmatpush.bf16.msra.mxu0 %v510
    %576 = vmatpush.bf16.msra.mxu0 %v508
    %577 = vmatpush.bf16.msra.mxu0 %v506
    %578 = vmatmul.bf16.gmra.mxu0 %v370
    %v579 = vpop.f32.mrf.mxu0
    %v580 = vadd.f32 %v406, %v579
    %v581 = vpop.f32.mrf.mxu0
    %582 = vdwg.mxu0
    %583 = vmatpush.bf16.msra.mxu0 %v536
    %584 = vmatpush.bf16.msra.mxu0 %v534
    %585 = vmatpush.bf16.msra.mxu0 %v532
    %586 = vmatpush.bf16.msra.mxu0 %v530
    %587 = vmatpush.bf16.msra.mxu0 %v528
    %588 = vmatpush.bf16.msra.mxu0 %v526
    %589 = vmatpush.bf16.msra.mxu0 %v524
    %590 = vmatpush.bf16.msra.mxu0 %v522
    %591 = vmatmul.bf16.gmra.mxu0 %v371
    %v592 = vpop.f32.mrf.mxu0
    %v593 = vadd.f32 %v580, %v592
    %v594 = vpop.f32.mrf.mxu0
    %595 = vdwg.mxu0
    %596 = vmatpush.bf16.msra.mxu0 %v521
    %597 = vmatpush.bf16.msra.mxu0 %v519
    %598 = vmatpush.bf16.msra.mxu0 %v517
    %599 = vmatpush.bf16.msra.mxu0 %v515
    %600 = vmatpush.bf16.msra.mxu0 %v513
    %601 = vmatpush.bf16.msra.mxu0 %v511
    %602 = vmatpush.bf16.msra.mxu0 %v509
    %603 = vmatpush.bf16.msra.mxu0 %v507
    %604 = vmatmul.bf16.gmra.mxu0 %v370
    %v605 = vpop.f32.mrf.mxu0
    %v606 = vadd.f32 %v407, %v605
    %v607 = vpop.f32.mrf.mxu0
    %608 = vdwg.mxu0
    %609 = vmatpush.bf16.msra.mxu0 %v537
    %610 = vmatpush.bf16.msra.mxu0 %v535
    %611 = vmatpush.bf16.msra.mxu0 %v533
    %612 = vmatpush.bf16.msra.mxu0 %v531
    %613 = vmatpush.bf16.msra.mxu0 %v529
    %614 = vmatpush.bf16.msra.mxu0 %v527
    %615 = vmatpush.bf16.msra.mxu0 %v525
    %616 = vmatpush.bf16.msra.mxu0 %v523
    %617 = vmatmul.bf16.gmra.mxu0 %v371
    %v618 = vpop.f32.mrf.mxu0
    %v619 = vadd.f32 %v606, %v618
    %v620 = vpop.f32.mrf.mxu0
    %621 = vdwg.mxu0
    %v622 = vmax.f32 %v593, 0.0
    %v623 = vmax.f32 %v619, 0.0
    %v624 = vpack.c.bf16 %v622, %v622
    %v625 = vpack.c.bf16 %v623, %v623
    %v626 = vld [vmem:[#allocation9] sm:$0xff]
    %v627 = vld [vmem:[#allocation9 + $0x8] sm:$0xff]
    %v628 = vld [vmem:[#allocation9 + $0x10] sm:$0xff]
    %v629 = vld [vmem:[#allocation9 + $0x18] sm:$0xff]
    %v630 = vld [vmem:[#allocation9 + $0x20] sm:$0xff]
    %v631 = vld [vmem:[#allocation9 + $0x28] sm:$0xff]
    %v632 = vld [vmem:[#allocation9 + $0x30] sm:$0xff]
    %v633 = vld [vmem:[#allocation9 + $0x38] sm:$0xff]
    %v634 = vld [vmem:[#allocation9 + $0x40] sm:$0xff]
    %v635 = vld [vmem:[#allocation9 + $0x48] sm:$0xff]
    %v636 = vld [vmem:[#allocation9 + $0x50] sm:$0xff]
    %v637 = vld [vmem:[#allocation9 + $0x58] sm:$0xff]
    %v638 = vld [vmem:[#allocation9 + $0x60] sm:$0xff]
    %v639 = vld [vmem:[#allocation9 + $0x68] sm:$0xff]
    %v640 = vld [vmem:[#allocation9 + $0x70] sm:$0xff]
    %v641 = vld [vmem:[#allocation9 + $0x78] sm:$0xff]
    %v642 = vld [vmem:[#allocation9 + $0x80] sm:$0xff]
    %v643 = vld [vmem:[#allocation9 + $0x88] sm:$0xff]
    %v644 = vld [vmem:[#allocation9 + $0x90] sm:$0xff]
    %v645 = vld [vmem:[#allocation9 + $0x98] sm:$0xff]
    %v646 = vld [vmem:[#allocation9 + $0xa0] sm:$0xff]
    %v647 = vld [vmem:[#allocation9 + $0xa8] sm:$0xff]
    %v648 = vld [vmem:[#allocation9 + $0xb0] sm:$0xff]
    %v649 = vld [vmem:[#allocation9 + $0xb8] sm:$0xff]
    %v650 = vld [vmem:[#allocation9 + $0xc0] sm:$0xff]
    %v651 = vld [vmem:[#allocation9 + $0xc8] sm:$0xff]
    %v652 = vld [vmem:[#allocation9 + $0xd0] sm:$0xff]
    %v653 = vld [vmem:[#allocation9 + $0xd8] sm:$0xff]
    %v654 = vld [vmem:[#allocation9 + $0xe0] sm:$0xff]
    %v655 = vld [vmem:[#allocation9 + $0xe8] sm:$0xff]
    %v656 = vld [vmem:[#allocation9 + $0xf0] sm:$0xff]
    %v657 = vld [vmem:[#allocation9 + $0xf8] sm:$0xff]
    %v658 = vld [vmem:[%s7] sm:$0x3]
    %v660 = vperm.slane %v658, 0
    %v661 = vperm.slane %v658, 1
    %v696 = vunpack.c.l.b16 %v626
    %v697 = vunpack.c.h.b16 %v626
    %v698 = vunpack.c.l.b16 %v627
    %v699 = vunpack.c.h.b16 %v627
    %v700 = vunpack.c.l.b16 %v628
    %v701 = vunpack.c.h.b16 %v628
    %v702 = vunpack.c.l.b16 %v629
    %v703 = vunpack.c.h.b16 %v629
    %v704 = vunpack.c.l.b16 %v630
    %v705 = vunpack.c.h.b16 %v630
    %v706 = vunpack.c.l.b16 %v631
    %v707 = vunpack.c.h.b16 %v631
    %v708 = vunpack.c.l.b16 %v632
    %v709 = vunpack.c.h.b16 %v632
    %v710 = vunpack.c.l.b16 %v633
    %v711 = vunpack.c.h.b16 %v633
    %v712 = vunpack.c.l.b16 %v634
    %v713 = vunpack.c.h.b16 %v634
    %v714 = vunpack.c.l.b16 %v635
    %v715 = vunpack.c.h.b16 %v635
    %v716 = vunpack.c.l.b16 %v636
    %v717 = vunpack.c.h.b16 %v636
    %v718 = vunpack.c.l.b16 %v637
    %v719 = vunpack.c.h.b16 %v637
    %v720 = vunpack.c.l.b16 %v638
    %v721 = vunpack.c.h.b16 %v638
    %v722 = vunpack.c.l.b16 %v639
    %v723 = vunpack.c.h.b16 %v639
    %v724 = vunpack.c.l.b16 %v640
    %v725 = vunpack.c.h.b16 %v640
    %v726 = vunpack.c.l.b16 %v641
    %v727 = vunpack.c.h.b16 %v641
    %v728 = vunpack.c.l.b16 %v642
    %v729 = vunpack.c.h.b16 %v642
    %v730 = vunpack.c.l.b16 %v643
    %v731 = vunpack.c.h.b16 %v643
    %v732 = vunpack.c.l.b16 %v644
    %v733 = vunpack.c.h.b16 %v644
    %v734 = vunpack.c.l.b16 %v645
    %v735 = vunpack.c.h.b16 %v645
    %v736 = vunpack.c.l.b16 %v646
    %v737 = vunpack.c.h.b16 %v646
    %v738 = vunpack.c.l.b16 %v647
    %v739 = vunpack.c.h.b16 %v647
    %v740 = vunpack.c.l.b16 %v648
    %v741 = vunpack.c.h.b16 %v648
    %v742 = vunpack.c.l.b16 %v649
    %v743 = vunpack.c.h.b16 %v649
    %v744 = vunpack.c.l.b16 %v650
    %v745 = vunpack.c.h.b16 %v650
    %v746 = vunpack.c.l.b16 %v651
    %v747 = vunpack.c.h.b16 %v651
    %v748 = vunpack.c.l.b16 %v652
    %v749 = vunpack.c.h.b16 %v652
    %v750 = vunpack.c.l.b16 %v653
    %v751 = vunpack.c.h.b16 %v653
    %v752 = vunpack.c.l.b16 %v654
    %v753 = vunpack.c.h.b16 %v654
    %v754 = vunpack.c.l.b16 %v655
    %v755 = vunpack.c.h.b16 %v655
    %v756 = vunpack.c.l.b16 %v656
    %v757 = vunpack.c.h.b16 %v656
    %v758 = vunpack.c.l.b16 %v657
    %v759 = vunpack.c.h.b16 %v657
    %v760 = vpack.c.b16 %v698, %v696
    %v761 = vpack.c.b16 %v699, %v697
    %v762 = vpack.c.b16 %v702, %v700
    %v763 = vpack.c.b16 %v703, %v701
    %v764 = vpack.c.b16 %v706, %v704
    %v765 = vpack.c.b16 %v707, %v705
    %v766 = vpack.c.b16 %v710, %v708
    %v767 = vpack.c.b16 %v711, %v709
    %v768 = vpack.c.b16 %v714, %v712
    %v769 = vpack.c.b16 %v715, %v713
    %v770 = vpack.c.b16 %v718, %v716
    %v771 = vpack.c.b16 %v719, %v717
    %v772 = vpack.c.b16 %v722, %v720
    %v773 = vpack.c.b16 %v723, %v721
    %v774 = vpack.c.b16 %v726, %v724
    %v775 = vpack.c.b16 %v727, %v725
    %v776 = vpack.c.b16 %v730, %v728
    %v777 = vpack.c.b16 %v731, %v729
    %v778 = vpack.c.b16 %v734, %v732
    %v779 = vpack.c.b16 %v735, %v733
    %v780 = vpack.c.b16 %v738, %v736
    %v781 = vpack.c.b16 %v739, %v737
    %v782 = vpack.c.b16 %v742, %v740
    %v783 = vpack.c.b16 %v743, %v741
    %v784 = vpack.c.b16 %v746, %v744
    %v785 = vpack.c.b16 %v747, %v745
    %v786 = vpack.c.b16 %v750, %v748
    %v787 = vpack.c.b16 %v751, %v749
    %v788 = vpack.c.b16 %v754, %v752
    %v789 = vpack.c.b16 %v755, %v753
    %v790 = vpack.c.b16 %v758, %v756
    %v791 = vpack.c.b16 %v759, %v757
    %824 = vmatpush.bf16.msra.mxu0 %v774
    %825 = vmatpush.bf16.msra.mxu0 %v772
    %826 = vmatpush.bf16.msra.mxu0 %v770
    %827 = vmatpush.bf16.msra.mxu0 %v768
    %828 = vmatpush.bf16.msra.mxu0 %v766
    %829 = vmatpush.bf16.msra.mxu0 %v764
    %830 = vmatpush.bf16.msra.mxu0 %v762
    %831 = vmatpush.bf16.msra.mxu0 %v760
    %832 = vmatmul.bf16.gmra.mxu0 %v624
    %v833 = vpop.f32.mrf.mxu0
    %v834 = vadd.f32 %v660, %v833
    %v835 = vpop.f32.mrf.mxu0
    %836 = vdwg.mxu0
    %837 = vmatpush.bf16.msra.mxu0 %v790
    %838 = vmatpush.bf16.msra.mxu0 %v788
    %839 = vmatpush.bf16.msra.mxu0 %v786
    %840 = vmatpush.bf16.msra.mxu0 %v784
    %841 = vmatpush.bf16.msra.mxu0 %v782
    %842 = vmatpush.bf16.msra.mxu0 %v780
    %843 = vmatpush.bf16.msra.mxu0 %v778
    %844 = vmatpush.bf16.msra.mxu0 %v776
    %845 = vmatmul.bf16.gmra.mxu0 %v625
    %v846 = vpop.f32.mrf.mxu0
    %v847 = vadd.f32 %v834, %v846
    %v848 = vpop.f32.mrf.mxu0
    %849 = vdwg.mxu0
    %850 = vmatpush.bf16.msra.mxu0 %v775
    %851 = vmatpush.bf16.msra.mxu0 %v773
    %852 = vmatpush.bf16.msra.mxu0 %v771
    %853 = vmatpush.bf16.msra.mxu0 %v769
    %854 = vmatpush.bf16.msra.mxu0 %v767
    %855 = vmatpush.bf16.msra.mxu0 %v765
    %856 = vmatpush.bf16.msra.mxu0 %v763
    %857 = vmatpush.bf16.msra.mxu0 %v761
    %858 = vmatmul.bf16.gmra.mxu0 %v624
    %v859 = vpop.f32.mrf.mxu0
    %v860 = vadd.f32 %v661, %v859
    %v861 = vpop.f32.mrf.mxu0
    %862 = vdwg.mxu0
    %863 = vmatpush.bf16.msra.mxu0 %v791
    %864 = vmatpush.bf16.msra.mxu0 %v789
    %865 = vmatpush.bf16.msra.mxu0 %v787
    %866 = vmatpush.bf16.msra.mxu0 %v785
    %867 = vmatpush.bf16.msra.mxu0 %v783
    %868 = vmatpush.bf16.msra.mxu0 %v781
    %869 = vmatpush.bf16.msra.mxu0 %v779
    %870 = vmatpush.bf16.msra.mxu0 %v777
    %871 = vmatmul.bf16.gmra.mxu0 %v625
    %v872 = vpop.f32.mrf.mxu0
    %v873 = vadd.f32 %v860, %v872
    %v874 = vpop.f32.mrf.mxu0
    %875 = vdwg.mxu0
    %v876 = vmax.f32 %v847, 0.0
    %v877 = vmax.f32 %v873, 0.0
    %v878 = vld [vmem:[%s8] sm:$0x3]
    %v880 = vperm.slane %v878, 0
    %v881 = vperm.slane %v878, 1
    %v884 = vmul.f32 %v876, %v880
    %v885 = vmul.f32 %v877, %v881
    %v886 = vadd.f32 %v884, %v885
    %887 = vadd.xlane.f32.xlu0 %v886
    %v888 = vpop.xlane.xlu0 %887
    %v889 = vld [vmem:[#allocation2] sm:$0x1]
    %v891 = vperm.slane %v889, 0
    %v893 = vadd.f32 %v888, %v891
    %894 = vxpose.xlu0.b32.start [1/16] %v893, 128
    %895 = vxpose.xlu0.b32.cont [2/16] 0.0, 128
    %896 = vxpose.xlu0.b32.cont [3/16] 0.0, 128
    %897 = vxpose.xlu0.b32.cont [4/16] 0.0, 128
    %898 = vxpose.xlu0.b32.cont [5/16] 0.0, 128
    %899 = vxpose.xlu0.b32.cont [6/16] 0.0, 128
    %900 = vxpose.xlu0.b32.cont [7/16] 0.0, 128
    %901 = vxpose.xlu0.b32.cont [8/16] 0.0, 128
    %902 = vxpose.xlu0.b32.cont [9/16] 0.0, 128
    %903 = vxpose.xlu0.b32.cont [10/16] 0.0, 128
    %904 = vxpose.xlu0.b32.cont [11/16] 0.0, 128
    %905 = vxpose.xlu0.b32.cont [12/16] 0.0, 128
    %906 = vxpose.xlu0.b32.cont [13/16] 0.0, 128
    %907 = vxpose.xlu0.b32.cont [14/16] 0.0, 128
    %908 = vxpose.xlu0.b32.cont [15/16] 0.0, 128
    %909 = vxpose.xlu0.b32.end [16/16] 0.0, 128
    %v910 = vpop.trf.xlu0
    %v911 = vpop.trf.xlu0
    %v912 = vpop.trf.xlu0
    %v913 = vpop.trf.xlu0
    %v914 = vpop.trf.xlu0
    %v915 = vpop.trf.xlu0
    %v916 = vpop.trf.xlu0
    %v917 = vpop.trf.xlu0
    %v918 = vpop.trf.xlu0
    %v919 = vpop.trf.xlu0
    %v920 = vpop.trf.xlu0
    %v921 = vpop.trf.xlu0
    %v922 = vpop.trf.xlu0
    %v923 = vpop.trf.xlu0
    %v924 = vpop.trf.xlu0
    %v925 = vpop.trf.xlu0
    %vm926 = vcmask 57344
    %927 = vst.msk [vmem:[#allocation11] sm:$0x1] %vm926, %v910
    // Predicated region
    $region58: #{kitty_forward.1} parent=1 // pred_check
      _
    $region59: #{kitty_forward.1} parent=1 // pred_check_branch
      %929 = sbr.rel (0) target = $region61
    $region60: #{kitty_forward.1} parent=1 // pred_region
      %931 = vsyncadd [#allocation5], 0
      %s933 = sshll.u32 [#allocation11], 4
      %s934 = int_to_ptr.vmem [resolvable:$true] %s933
      %s935 = sshll.u32 %s10, 4
      %s936 = int_to_ptr.hbm [resolvable:$true] %s935
      %938 = dma.vmem_to_hbm [thread:$0]  %s934, 16, %s936, [#allocation5]
    $region61: #{kitty_forward.1} parent=1 // pred_fallthru
      _
    // Predicated region
    $region62: #{kitty_forward.1} parent=1 // pred_check
      _
    $region63: #{kitty_forward.1} parent=1 // pred_check_branch
      %940 = sbr.rel (0) target = $region65
    $region64: #{kitty_forward.1} parent=1 // pred_region
      %942 = dma.done [#allocation5], 16
    $region65: #{kitty_forward.1} parent=1 // pred_fallthru
      _
    %943 = vsyncpa [#allocation4], 1
    %944 = vsyncpa [#allocation7], 1
    %945 = vsyncpa [#allocation10], 1
    %946 = vsyncpa [#allocation5], 1

</llo_original>
